<compile_context>
chip_gen: v7x
topology: tpu7x:2x2x1
jax: 0.10.0
libtpu: 0.0.40
codegen_flags: <defaults>
</compile_context>

<pallas_src>
import functools
import math

import jax
import jax.numpy as jnp
from jax.experimental import pallas as pl
from jax.experimental.pallas import tpu as pltpu


def _bsl_loss_kernel(*refs, mode, inv_t1, t2, n_rows, logn):
    """One (TB, C) batch tile -> per-block partial sum of per-row log terms.

    refs ('multi')     : pos_row (1,B), pos_col (B,1), y (TB,C), out (8,128)
    refs (other modes) : y (TB,C), out (8,128)
    """
    if mode == "multi":
        pos_row_ref, pos_col_ref, y_ref, out_ref = refs
    else:
        y_ref, out_ref = refs

    i = pl.program_id(0)
    z = y_ref[...].astype(jnp.float32) * inv_t1                     # (TB, C)
    tb, c = z.shape

    # Row-validity mask for the (possibly padded) last block.  Garbage rows are
    # deliberately NOT sanitized: they only feed per-row terms discarded below.
    row_ids = i * tb + jax.lax.broadcasted_iota(jnp.int32, (tb, 1), 0)
    valid = row_ids < n_rows                                         # (TB, 1)

    log_pos = z[:, 0:1]                                              # (TB, 1) = y[:,0]/t1

    if mode == "test":
        # ratio[i,j] = pos[j] / neg[i,j]; the positive-column total is handled
        # in the wrapper, so the kernel only accumulates per-row negative sums.
        per_row = jnp.sum(z, axis=-1, keepdims=True) - log_pos       # (TB, 1)
    else:
        # Masked logsumexp over the negative columns.  Lane-aligned iota mask;
        # no second select — exp(-inf) == 0 already zeroes column 0.
        col_ids = jax.lax.broadcasted_iota(jnp.int32, (tb, c), 1)
        zneg = jnp.where(col_ids > 0, z, -jnp.inf)
        m = jnp.max(zneg, axis=-1, keepdims=True)                    # (TB, 1)
        s = jnp.sum(jnp.exp(zneg - m), axis=-1, keepdims=True)       # (TB, 1)
        lse = m + jnp.log(s)                                         # log sum_j exp(y_neg/t1)

        if mode == "single":
            per_row = log_pos - (lse - logn)
        elif mode == "reweight":
            per_row = log_pos - t2 * lse
        else:  # mode == 'multi'
            # Equality mask on exp(y[:,0]/t1); pos_blk and pos_all are the same
            # ops on the same values, so the diagonal self-match is bit-exact.
            pos_all = jnp.exp(pos_row_ref[...].astype(jnp.float32) * inv_t1)   # (1, B)
            pos_blk = jnp.exp(log_pos)                                          # (TB, 1)
            eq = (pos_blk == pos_all).astype(jnp.float32)                       # (TB, B)
            # One MXU pass yields both reductions over the mask:
            # rhs[:, 0] = exp(pos/t1) (weighted sum), rhs[:, 1] = 1 (count).
            pos_col = jnp.exp(pos_col_ref[...].astype(jnp.float32) * inv_t1)    # (B, 1)
            lane2 = jax.lax.broadcasted_iota(jnp.int32, (pos_col.shape[0], 2), 1)
            rhs = jnp.where(lane2 == 0, pos_col, 1.0)                            # (B, 2)
            prod = jnp.dot(eq, rhs, preferred_element_type=jnp.float32)          # (TB, 2)
            pos_agg = prod[:, 0:1] / prod[:, 1:2]                                # (TB, 1)
            per_row = jnp.log(pos_agg) - t2 * (lse - logn)

    partial = jnp.sum(jnp.where(valid, per_row, 0.0), axis=0, keepdims=True)     # (1, 1)

    # Each grid step owns a distinct lane-dense (8, 128) output block; only
    # element [0, 0] carries the partial sum (wrapper does jnp.sum over all).
    r = jax.lax.broadcasted_iota(jnp.int32, out_ref.shape, 0)
    lane = jax.lax.broadcasted_iota(jnp.int32, out_ref.shape, 1)
    out_ref[...] = jnp.where((r == 0) & (lane == 0), partial, 0.0)


def _vmem_limit_bytes():
    """Generation-aware scoped-VMEM request (v5e/v6e: 128 MiB, v7x: 64 MiB)."""
    try:
        cap = int(pltpu.get_tpu_info().vmem_capacity_bytes)
    except Exception:
        cap = 64 * 1024 * 1024          # assume the smallest (v7x) if query fails
    return (cap * 3) // 4


def _pick_block_rows(B, C, itemsize, mode, vmem_limit, sublane):
    """Largest sublane-aligned batch tile that fits ~half the scoped VMEM."""
    # Per-row bytes: double-buffered y input + ~two full-width f32 temporaries
    # (z and exp(zneg - m)) + the (tb, B) f32 eq mask for 'multi'.
    per_row = 2 * C * itemsize + 2 * 4 * C + (4 * B if mode == "multi" else 0)
    budget = vmem_limit // 2            # headroom: side inputs, output, internal scratch
    max_tb = max(sublane, (budget // per_row) // sublane * sublane)
    return min(1024, max_tb)


def bsl_loss(y_pred, y_true=None, *, temperature=1.0, temperature2=1.0,
             temperature3=1.0, mode="test", block_rows=None):
    """JAX/Pallas equivalent of BSLLoss.forward (y_true / temperature3 unused, kept for parity)."""
    del y_true, temperature3            # never used in the PyTorch forward
    B, C = y_pred.shape
    N = C - 1
    if mode == "test" and N != B:
        raise ValueError("mode='test' requires num_negs == batch_size "
                         "(torch broadcasting of (B,) against (B, N))")

    itemsize = jnp.dtype(y_pred.dtype).itemsize
    sublane = max(8, 32 // itemsize)    # f32: 8 rows, bf16: 16 rows
    vmem_limit = _vmem_limit_bytes()

    if block_rows is None:
        block_rows = _pick_block_rows(B, C, itemsize, mode, vmem_limit, sublane)
    tb = B if B <= block_rows else block_rows     # full-dim block, or aligned tile
    if tb != B:
        assert tb % sublane == 0, f"block_rows must be a multiple of {sublane}"
    num_blocks = pl.cdiv(B, tb)

    inv_t1 = 1.0 / float(temperature)
    kernel = functools.partial(
        _bsl_loss_kernel, mode=mode, inv_t1=inv_t1, t2=float(temperature2),
        n_rows=B, logn=float(math.log(N)))

    y_spec = pl.BlockSpec((tb, C), lambda i: (i, 0))
    if mode == "multi":
        # Positive logits both lane-dense (for the B-wide equality mask) and
        # sublane-dense (as the MXU rhs column); only 'multi' needs them.
        operands = (y_pred[:, 0].reshape(1, B), y_pred[:, 0:1], y_pred)
        in_specs = [pl.BlockSpec((1, B), lambda i: (0, 0)),
                    pl.BlockSpec((B, 1), lambda i: (0, 0)),
                    y_spec]
    else:
        operands = (y_pred,)
        in_specs = [y_spec]

    out = pl.pallas_call(
        kernel,
        out_shape=jax.ShapeDtypeStruct((8, 128 * num_blocks), jnp.float32),
        grid=(num_blocks,),
        in_specs=in_specs,
        out_specs=pl.BlockSpec((8, 128), lambda i: (0, i)),
        compiler_params=pltpu.CompilerParams(
            dimension_semantics=("parallel",),
            vmem_limit_bytes=vmem_limit),
    )(*operands)

    raw = jnp.sum(out)                  # sum of per-block partials (tiny)
    if mode == "test":
        # loss = -(1/(B*N)) * (B * sum_j y[j,0]/t1 - sum_ij y[i,1+j]/t1)
        s_pos = jnp.sum(y_pred[:, 0].astype(jnp.float32)) * inv_t1
        return (raw - B * s_pos) / float(B * N)
    return -raw / float(B)


def _ref_loss(y, t1, t2, mode):
    """Pure-JAX mirror of the PyTorch forward, for correctness checking."""
    pos = jnp.exp(y[:, 0] / t1)
    neg = jnp.exp(y[:, 1:] / t1)
    if mode == "multi":
        user = pos.reshape(-1, 1)
        mask = (user == user.T).astype(jnp.float32)
        pos = (pos[None, :] * mask).sum(1) / mask.sum(1)
        neg = jnp.power(jnp.mean(neg, axis=-1), t2)
    elif mode == "single":
        neg = jnp.mean(neg, axis=-1)
    elif mode == "reweight":
        neg = jnp.power(jnp.sum(neg, axis=-1), t2)
    return -jnp.mean(jnp.log(pos / neg))


if __name__ == "__main__":
    t1, t2 = 0.5, 2.0
    k1, k2, k3 = jax.random.split(jax.random.PRNGKey(0), 3)

    # Case 1: batch == num_negs so the default 'test' mode's broadcast is defined.
    B1, negs1 = 8, 8
    y1 = jax.random.normal(k1, (B1, 1 + negs1), dtype=jnp.float32)
    for mode in ("single", "reweight", "multi", "test"):
        loss = jax.block_until_ready(
            bsl_loss(y1, None, temperature=t1, temperature2=t2, mode=mode))
        ref = _ref_loss(y1, t1, t2, mode)
        assert jnp.allclose(loss, ref, rtol=1e-4, atol=1e-5), (mode, loss, ref)

    # Case 2: exercise the batch grid + padded last tile (B=20, tb=8 -> grid=3).
    B2, negs2 = 20, 31
    y2 = jax.random.normal(k2, (B2, 1 + negs2), dtype=jnp.float32)
    for mode in ("single", "reweight", "multi"):
        loss = jax.block_until_ready(
            bsl_loss(y2, None, temperature=t1, temperature2=t2, mode=mode,
                     block_rows=8))
        ref = _ref_loss(y2, t1, t2, mode)
        assert jnp.allclose(loss, ref, rtol=1e-4, atol=1e-5), (mode, loss, ref)

    # Case 3: bf16 inputs (16-row sublane tiles), grid of 2 with a padded block.
    B3, negs3 = 24, 24
    y3 = jax.random.normal(k3, (B3, 1 + negs3), dtype=jnp.float32).astype(jnp.bfloat16)
    for mode in ("single", "multi", "test"):
        loss = jax.block_until_ready(
            bsl_loss(y3, None, temperature=t1, temperature2=t2, mode=mode,
                     block_rows=16))
        ref = _ref_loss(y3.astype(jnp.float32), t1, t2, mode)
        assert jnp.allclose(loss, ref, rtol=1e-3, atol=1e-4), (mode, loss, ref)

    print("KERNEL_OK")
</pallas_src>

<mosaic_0001>
module attributes {stable_mosaic.version = 11 : i64} {
  func.func @_bsl_loss_kernel(%arg0: i32, %arg1: memref<8x9xf32, #tpu.memory_space<vmem>>, %arg2: memref<8x128xf32, #tpu.memory_space<vmem>>) attributes {dimension_semantics = [#tpu.dimension_semantics<parallel>], iteration_bounds = array<i64: 1>, scalar_prefetch = 0 : i64, scratch_operands = 0 : i64, tpu.core_type = #tpu.core_type<tc>, window_params = [{transform_indices = @transform_0, window_bounds = array<i64: 8, 9>}, {transform_indices = @transform_1, window_bounds = array<i64: 8, 128>}]} {
    %c0 = arith.constant 0 : index
    %c0_0 = arith.constant 0 : index
    %0 = vector.load %arg1[%c0, %c0_0] : memref<8x9xf32, #tpu.memory_space<vmem>>, vector<8x9xf32>
    %cst = arith.constant 2.000000e+00 : f32
    %1 = vector.broadcast %cst : f32 to vector<8x9xf32>
    %2 = arith.mulf %0, %1 : vector<8x9xf32>
    %c8_i32 = arith.constant 8 : i32
    %3 = arith.muli %arg0, %c8_i32 : i32
    %4 = tpu.iota {dimensions = array<i32: 0>} : vector<8x1xi32>
    %5 = vector.broadcast %3 : i32 to vector<8x1xi32>
    %6 = arith.addi %5, %4 : vector<8x1xi32>
    %c8_i32_1 = arith.constant 8 : i32
    %7 = vector.broadcast %c8_i32_1 : i32 to vector<8x1xi32>
    %8 = arith.cmpi slt, %6, %7 : vector<8x1xi32>
    %9 = vector.extract_strided_slice %2 {offsets = [0, 0], sizes = [8, 1], strides = [1, 1]} : vector<8x9xf32> to vector<8x1xf32>
    %10 = tpu.iota {dimensions = array<i32: 1>} : vector<8x9xi32>
    %c0_i32 = arith.constant 0 : i32
    %11 = vector.broadcast %c0_i32 : i32 to vector<8x9xi32>
    %12 = arith.cmpi sgt, %10, %11 : vector<8x9xi32>
    %cst_2 = arith.constant 0xFF800000 : f32
    %13 = vector.broadcast %cst_2 : f32 to vector<8x9xf32>
    %14 = arith.select %12, %2, %13 : vector<8x9xi1>, vector<8x9xf32>
    %cst_3 = arith.constant dense<0xFF800000> : vector<8xf32>
    %15 = vector.multi_reduction <maximumf>, %14, %cst_3 [1] : vector<8x9xf32> to vector<8xf32>
    %16 = vector.shape_cast %15 : vector<8xf32> to vector<8x1xf32>
    %17 = vector.broadcast %16 : vector<8x1xf32> to vector<8x9xf32>
    %18 = arith.subf %14, %17 : vector<8x9xf32>
    %19 = math.exp %18 : vector<8x9xf32>
    %cst_4 = arith.constant dense<0.000000e+00> : vector<8xf32>
    %20 = vector.multi_reduction <add>, %19, %cst_4 [1] : vector<8x9xf32> to vector<8xf32>
    %21 = vector.shape_cast %20 : vector<8xf32> to vector<8x1xf32>
    %22 = math.log %21 : vector<8x1xf32>
    %23 = arith.addf %16, %22 : vector<8x1xf32>
    %cst_5 = arith.constant 2.07944155 : f32
    %24 = vector.broadcast %cst_5 : f32 to vector<8x1xf32>
    %25 = arith.subf %23, %24 : vector<8x1xf32>
    %26 = arith.subf %9, %25 : vector<8x1xf32>
    %cst_6 = arith.constant 0.000000e+00 : f32
    %27 = vector.broadcast %cst_6 : f32 to vector<8x1xf32>
    %28 = arith.select %8, %26, %27 : vector<8x1xi1>, vector<8x1xf32>
    %cst_7 = arith.constant dense<0.000000e+00> : vector<1xf32>
    %29 = vector.multi_reduction <add>, %28, %cst_7 [0] : vector<8x1xf32> to vector<1xf32>
    %30 = vector.shape_cast %29 : vector<1xf32> to vector<1x1xf32>
    %31 = tpu.iota {dimensions = array<i32: 0>} : vector<8x128xi32>
    %32 = tpu.iota {dimensions = array<i32: 1>} : vector<8x128xi32>
    %c0_i32_8 = arith.constant 0 : i32
    %33 = vector.broadcast %c0_i32_8 : i32 to vector<8x128xi32>
    %34 = arith.cmpi eq, %31, %33 : vector<8x128xi32>
    %c0_i32_9 = arith.constant 0 : i32
    %35 = vector.broadcast %c0_i32_9 : i32 to vector<8x128xi32>
    %36 = arith.cmpi eq, %32, %35 : vector<8x128xi32>
    %37 = arith.andi %34, %36 : vector<8x128xi1>
    %cst_10 = arith.constant 0.000000e+00 : f32
    %38 = vector.shape_cast %30 : vector<1x1xf32> to vector<1x1xf32>
    %39 = vector.broadcast %38 : vector<1x1xf32> to vector<8x128xf32>
    %40 = vector.broadcast %cst_10 : f32 to vector<8x128xf32>
    %41 = arith.select %37, %39, %40 : vector<8x128xi1>, vector<8x128xf32>
    %c0_11 = arith.constant 0 : index
    %c0_12 = arith.constant 0 : index
    %42 = vector.load %arg2[%c0_11, %c0_12] : memref<8x128xf32, #tpu.memory_space<vmem>>, vector<8x128xf32>
    tpu.vector_store %arg2[%c0_11, %c0_12], %41 {strides = array<i32>} : memref<8x128xf32, #tpu.memory_space<vmem>>, vector<8x128xf32>,
    return
  }
  func.func @transform_0(%arg0: i32) -> (i32, i32) {
    %c0_i32 = arith.constant 0 : i32
    %c0_i32_0 = arith.constant 0 : i32
    return %arg0, %c0_i32 : i32, i32
  }
  func.func @transform_1(%arg0: i32) -> (i32, i32) {
    %c0_i32 = arith.constant 0 : i32
    %c0_i32_0 = arith.constant 0 : i32
    return %c0_i32, %arg0 : i32, i32
  }
}

</mosaic_0001>

<llo_original>
// kernel: tpu_custom_call.1
$region0: #{tpu_custom_call.1}
  #allocation0 [shape = 'u32[]', space=smem, size = 0x4, offset = 0x4, fixed_abs, tag = 'smem constant byte address 0x4 - core index']
  #allocation1 [shape = 'u32[144,128]{1,0:T(1,128)}', space=vmem, size = 0x12000, scoped, tag = 'internal scratch']
  %s0 = inlined_call_operand.hbm [shape: f32[8,9], index: 0, kind: input, shape index: {}]
  %s1 = inlined_call_operand.hbm [shape: f32[8,128], index: 1, kind: output, shape index: {}]
  %s2 = sld [smem:[#allocation0]]
  $region18: #{tpu_custom_call.1} parent=0
    _
  %s4 = ssub.s32 1, %s2
  %s5 = scalar_select 0, %s4, %s2
  $region1: #{tpu_custom_call.1} parent=0
    #allocation2 [shape = 'u8[4096]{0}', space=vmem, size = 0x1000, scoped, tag = 'input window, operand 0, single buffered']
    #allocation3 [shape = 's32[1]{0}', space=sflag, size = 0x4, scoped, tag = 'scoped memory for tpu_custom_call.1']
    #allocation4 [shape = 's32[1]{0}', space=sflag, size = 0x4, scoped, tag = 'scoped memory for tpu_custom_call.1']
    #allocation5 [shape = 'u8[4096]{0}', space=vmem, size = 0x1000, scoped, tag = 'output window, operand 0, single buffered']
    %6 = vsyncpa [#allocation3], 0
    %7 = vsyncpa [#allocation4], 0
    // Predicated region
    $region2: #{tpu_custom_call.1} parent=1 // pred_check
      _
    $region3: #{tpu_custom_call.1} parent=1 // pred_check_branch
      %9 = sbr.rel (0) target = $region5
    $region4: #{tpu_custom_call.1} parent=1 // pred_region
      %s11 = ssub.s32 128, 128
      %12 = vsyncadd [#allocation3], %s11
      %s14 = sshll.u32 [#allocation2], 4
      %s15 = int_to_ptr.vmem [resolvable:$true] %s14
      %17 = dma.hbm_to_vmem [thread:$0]  %s0, 128, %s15, [#allocation3]
    $region5: #{tpu_custom_call.1} parent=1 // pred_fallthru
      _
    // Predicated region
    $region6: #{tpu_custom_call.1} parent=1 // pred_check
      _
    $region7: #{tpu_custom_call.1} parent=1 // pred_check_branch
      %19 = sbr.rel (0) target = $region9
    $region8: #{tpu_custom_call.1} parent=1 // pred_region
      %20 = dma.done [#allocation3], 128
    $region9: #{tpu_custom_call.1} parent=1 // pred_fallthru
      _
    %v21 = vld [vmem:[#allocation2] sm:$0xff]
    %v22 = vmul.f32 %v21, 2.0
    %s23 = smul.u32 0, 8
    %v24 = vlaneseq
    %v25 = vshrl.u32 %v24, 7
    %v26 = vstv %s23
    %v27 = vadd.s32 %v26, %v25
    %vm28 = vcmp.lt.s32.totalorder %v27, 8
    %v29 = vlaneseq
    %v30 = vand.u32 %v29, 127
    %vm31 = vcmp.gt.s32.totalorder %v30, 0
    %v32 = vsel %vm31, %v22, -inf
    %vm33 = vcmask 72704
    %v34 = vsel %vm33, %v32, -inf
    %35 = vmax.xlane.f32.xlu0 %v34
    %v36 = vpop.xlane.xlu0 %35
    %v37 = vsub.f32 %v32, %v36
    %v38 = vmul.f32 %v37, 1.442695
    %v39 = vpow.pop %v38
    %v40 = vsel %vm33, %v39, 0.0
    %41 = vadd.xlane.f32.xlu0 %v40
    %v42 = vpop.xlane.xlu0 %41
    %v43 = vlog2.pop %v42
    %v44 = vmul.f32 %v43, 0.6931472
    %v45 = vadd.f32 %v36, %v44
    %v46 = vsub.f32 %v45, 2.0794415
    %v47 = vsub.f32 %v22, %v46
    %v48 = vsel %vm28, %v47, 0.0
    %vm49 = vcmask 7168
    %v50 = vsel %vm49, %v48, 0.0
    %v51 = vrot.slane %v50, 4
    %v52 = vadd.f32 %v50, %v51
    %v53 = vrot.slane %v52, 2
    %v54 = vadd.f32 %v52, %v53
    %v55 = vrot.slane %v54, 1
    %v56 = vadd.f32 %v54, %v55
    %vm57 = vcmp.eq.s32.totalorder %v25, 0
    %vm58 = vcmp.eq.s32.totalorder %v30, 0
    %vm59 = vmand %vm57, %vm58
    %61 = vset.pattern.permute.xlu0 0
    %62 = vperm.xlu0 %61, %v56
    %v63 = vpop.permute.xlu0 %62
    %v65 = vsel %vm59, %v63, 0.0
    %66 = vst [vmem:[#allocation5] sm:$0xff] %v65
    // Predicated region
    $region10: #{tpu_custom_call.1} parent=1 // pred_check
      _
    $region11: #{tpu_custom_call.1} parent=1 // pred_check_branch
      %68 = sbr.rel (0) target = $region13
    $region12: #{tpu_custom_call.1} parent=1 // pred_region
      %s70 = ssub.s32 128, 128
      %71 = vsyncadd [#allocation4], %s70
      %s73 = sshll.u32 [#allocation5], 4
      %s74 = int_to_ptr.vmem [resolvable:$true] %s73
      %76 = dma.vmem_to_hbm [thread:$0]  %s74, 128, %s1, [#allocation4]
    $region13: #{tpu_custom_call.1} parent=1 // pred_fallthru
      _
    // Predicated region
    $region14: #{tpu_custom_call.1} parent=1 // pred_check
      _
    $region15: #{tpu_custom_call.1} parent=1 // pred_check_branch
      %78 = sbr.rel (0) target = $region17
    $region16: #{tpu_custom_call.1} parent=1 // pred_region
      %79 = dma.done [#allocation4], 128
    $region17: #{tpu_custom_call.1} parent=1 // pred_fallthru
      _
    %80 = vsyncpa [#allocation3], 1
    %81 = vsyncpa [#allocation4], 1

</llo_original>
